<compile_context>
chip_gen: v7x
topology: tpu7x:2x2x1
jax: 0.10.0
libtpu: 0.0.40
codegen_flags: <defaults>
</compile_context>

<pallas_src>
import functools

import jax
import jax.numpy as jnp
from jax import lax
from jax.experimental import pallas as pl
from jax.experimental.pallas import tpu as pltpu


def _l2norm_kernel(x_ref, o_ref, *, eps, scale_in_input_dtype):
    x = x_ref[...]
    # f32 accumulation for the square-sum (mandatory on v5e: no bf16 VPU).
    xf = x.astype(jnp.float32)
    sq_sum = jnp.sum(xf * xf, axis=-1, keepdims=True)          # (rows, 1)
    # Exact rsqrt on the (rows, 1) column -> one EUP op per row instead of a
    # full-width per-element divide.  max(sq_sum, eps^2) preserves the
    # F.normalize clamp: denominator is max(||x||, eps) in both branches.
    inv = lax.rsqrt(jnp.maximum(sq_sum, eps * eps))            # (rows, 1)
    if scale_in_input_dtype:
        # Sub-32-bit input on v6e/v7x: scale straight from the ref dtype and
        # avoid materializing a full (rows, D) f32 copy of the tile in VMEM.
        o_ref[...] = (x * inv.astype(x.dtype)).astype(o_ref.dtype)
    else:
        o_ref[...] = (xf * inv).astype(o_ref.dtype)


def _round_up(v, m):
    return ((v + m - 1) // m) * m


def _tpu_hw_info():
    """Best-effort hardware query with conservative fallbacks.

    Returns (vmem_capacity_bytes, multi_tensorcore, is_v5_lite).
    Fallbacks (64 MiB VMEM, single-TC, not-v5e) are always safe; they only
    cost a little performance if detection fails.
    """
    vmem_bytes = 64 << 20   # conservative: v7x per-TC physical VMEM
    multi_tc = False
    is_v5_lite = False
    try:
        info = pltpu.get_tpu_info()
        vmem_bytes = int(getattr(info, "vmem_capacity_bytes", vmem_bytes))
    except Exception:
        pass
    try:
        kind = jax.devices()[0].device_kind.lower()
        # v4 / v5p expose megacore (2 TCs per XLA device); v7x has 2 TCs/chip.
        multi_tc = ("v4" in kind) or ("v5p" in kind) or ("7" in kind)
        is_v5_lite = ("v5e" in kind) or ("v5 lite" in kind) or ("v5lite" in kind)
    except Exception:
        pass
    return vmem_bytes, multi_tc, is_v5_lite


def l2_normalize(x, *, eps=1e-12, block_rows=None):
    """L2-normalize a (B, D) array along dim=1 (matches F.normalize(p=2, dim=1))."""
    B, D = x.shape
    orig_dtype = x.dtype
    itemsize = jnp.dtype(x.dtype).itemsize
    # Sublane packing: 8 rows/vreg for 32-bit, 16 for bf16/fp16, 32 for 8-bit.
    sublane = max(8, 32 // itemsize)

    # Lane-pad the feature axis to a multiple of 128 so the output BlockSpec is
    # lane-dense (unmasked vst instead of vst.msk).  Zero padding leaves the
    # per-row L2 norm unchanged, so results are exact.
    D_pad = _round_up(D, 128)
    if D_pad != D:
        x = jnp.pad(x, ((0, 0), (0, D_pad - D)))

    vmem_capacity, multi_tc, is_v5_lite = _tpu_hw_info()
    # Only skip the f32 full-tile materialization where the VPU has native
    # sub-32-bit support (v6e/v7x); keep the f32 path on v5e.
    scale_in_input_dtype = (itemsize < 4) and (not is_v5_lite)

    # Tile budget for the 4 double-buffered in+out tiles: ~half of physical
    # VMEM, capped at 64 MiB (v5e/v6e: 64 MiB of 128; v7x: 32 MiB of 64).
    vmem_buffer_budget = max(16 << 20, min(vmem_capacity // 2, 64 << 20))

    bytes_per_row = 4 * D_pad * itemsize
    if itemsize < 4 and not scale_in_input_dtype:
        bytes_per_row += D_pad * 4  # f32 working copy of the tile (v5e path)

    if block_rows is None:
        max_rows = max(1, vmem_buffer_budget // bytes_per_row)
        block_rows = max(sublane, (max_rows // sublane) * sublane)
        block_rows = min(block_rows, _round_up(B, sublane))
        if multi_tc and B > sublane:
            # 2 TensorCores share the parallel grid axis: target >= 4 steps
            # (>= 2 per core so each core still software-pipelines), but never
            # shrink tiles below ~512 rows where per-step overhead dominates.
            quarter = _round_up(pl.cdiv(B, 4), sublane)
            min_tile = min(_round_up(B, sublane), max(sublane, 512))
            block_rows = max(sublane, min(block_rows, max(quarter, min_tile)))
    else:
        block_rows = max(sublane, _round_up(block_rows, sublane))

    grid = (pl.cdiv(B, block_rows),)

    # VMEM limit: the double-buffered in+out tiles (+ f32 working tile on the
    # v5e sub-32-bit path) plus headroom, kept below physical capacity.
    tile_bytes = block_rows * D_pad * itemsize
    working_f32 = (
        block_rows * D_pad * 4 if (itemsize < 4 and not scale_in_input_dtype) else 0
    )
    vmem_limit = 4 * tile_bytes + working_f32 + (8 << 20)
    vmem_limit = min(vmem_limit, max(32 << 20, vmem_capacity - (16 << 20)))

    kernel = functools.partial(
        _l2norm_kernel, eps=float(eps), scale_in_input_dtype=scale_in_input_dtype
    )

    out = pl.pallas_call(
        kernel,
        out_shape=jax.ShapeDtypeStruct((B, D_pad), orig_dtype),
        grid_spec=pl.GridSpec(
            grid=grid,
            # Full (padded) feature axis in one block: the dim=1 reduction
            # happens entirely in-kernel.
            in_specs=[pl.BlockSpec((block_rows, D_pad), lambda i: (i, 0))],
            out_specs=pl.BlockSpec((block_rows, D_pad), lambda i: (i, 0)),
        ),
        compiler_params=pltpu.CompilerParams(
            dimension_semantics=("parallel",),
            vmem_limit_bytes=int(vmem_limit),
        ),
    )(x)

    if D_pad != D:
        out = out[:, :D]
    return out


def _reference(x, eps=1e-12):
    norm = jnp.sqrt(jnp.sum(x.astype(jnp.float32) ** 2, axis=1, keepdims=True))
    return (x.astype(jnp.float32) / jnp.maximum(norm, eps)).astype(x.dtype)


if __name__ == "__main__":
    key = jax.random.PRNGKey(0)

    # Small shape consistent with the module: a batch of feature vectors,
    # normalized along dim=1.
    B, D = 8, 128
    x = jax.random.normal(key, (B, D), dtype=jnp.float32)
    out = jax.block_until_ready(l2_normalize(x, eps=1e-12))
    assert jnp.allclose(out, _reference(x), atol=1e-5, rtol=1e-5), "mismatch (base)"

    # Larger, ragged batch to cover the auto-tiling path.
    B2, D2 = 1000, 256
    x2 = jax.random.normal(jax.random.PRNGKey(1), (B2, D2), dtype=jnp.float32)
    out2 = jax.block_until_ready(l2_normalize(x2))
    assert jnp.allclose(out2, _reference(x2), atol=1e-5, rtol=1e-5), "mismatch (large)"

    # Non-multiple-of-128 feature dim to exercise the lane-padding path.
    B3, D3 = 64, 200
    x3 = jax.random.normal(jax.random.PRNGKey(2), (B3, D3), dtype=jnp.float32)
    out3 = jax.block_until_ready(l2_normalize(x3))
    assert jnp.allclose(out3, _reference(x3), atol=1e-5, rtol=1e-5), "mismatch (ragged D)"

    print("KERNEL_OK")
</pallas_src>

<mosaic_0001>
module attributes {stable_mosaic.version = 11 : i64} {
  func.func @_l2norm_kernel(%arg0: i32, %arg1: memref<8x128xf32, #tpu.memory_space<vmem>>, %arg2: memref<8x128xf32, #tpu.memory_space<vmem>>) attributes {dimension_semantics = [#tpu.dimension_semantics<parallel>], iteration_bounds = array<i64: 1>, scalar_prefetch = 0 : i64, scratch_operands = 0 : i64, tpu.core_type = #tpu.core_type<tc>, window_params = [{transform_indices = @transform_0, window_bounds = array<i64: 8, 128>}, {transform_indices = @transform_1, window_bounds = array<i64: 8, 128>}]} {
    %c0 = arith.constant 0 : index
    %c0_0 = arith.constant 0 : index
    %0 = vector.load %arg1[%c0, %c0_0] : memref<8x128xf32, #tpu.memory_space<vmem>>, vector<8x128xf32>
    %1 = arith.mulf %0, %0 : vector<8x128xf32>
    %cst = arith.constant dense<0.000000e+00> : vector<8xf32>
    %2 = vector.multi_reduction <add>, %1, %cst [1] : vector<8x128xf32> to vector<8xf32>
    %3 = vector.shape_cast %2 : vector<8xf32> to vector<8x1xf32>
    %cst_1 = arith.constant 1.000000e-24 : f32
    %4 = vector.broadcast %cst_1 : f32 to vector<8x1xf32>
    %5 = arith.maximumf %3, %4 : vector<8x1xf32>
    %6 = math.rsqrt %5 : vector<8x1xf32>
    %7 = vector.broadcast %6 : vector<8x1xf32> to vector<8x128xf32>
    %8 = arith.mulf %0, %7 : vector<8x128xf32>
    %c0_2 = arith.constant 0 : index
    %c0_3 = arith.constant 0 : index
    %9 = vector.load %arg2[%c0_2, %c0_3] : memref<8x128xf32, #tpu.memory_space<vmem>>, vector<8x128xf32>
    tpu.vector_store %arg2[%c0_2, %c0_3], %8 {strides = array<i32>} : memref<8x128xf32, #tpu.memory_space<vmem>>, vector<8x128xf32>,
    return
  }
  func.func @transform_0(%arg0: i32) -> (i32, i32) {
    %c0_i32 = arith.constant 0 : i32
    %c0_i32_0 = arith.constant 0 : i32
    return %arg0, %c0_i32 : i32, i32
  }
  func.func @transform_1(%arg0: i32) -> (i32, i32) {
    %c0_i32 = arith.constant 0 : i32
    %c0_i32_0 = arith.constant 0 : i32
    return %arg0, %c0_i32 : i32, i32
  }
}

</mosaic_0001>

<llo_original>
// kernel: tpu_custom_call.1
$region0: #{tpu_custom_call.1}
  #allocation0 [shape = 'u32[]', space=smem, size = 0x4, offset = 0x4, fixed_abs, tag = 'smem constant byte address 0x4 - core index']
  #allocation1 [shape = 'u32[144,128]{1,0:T(1,128)}', space=vmem, size = 0x12000, scoped, tag = 'internal scratch']
  %s0 = inlined_call_operand.hbm [shape: f32[8,128], index: 0, kind: input, shape index: {}]
  %s1 = inlined_call_operand.hbm [shape: f32[8,128], index: 1, kind: output, shape index: {}]
  %s2 = sld [smem:[#allocation0]]
  $region18: #{tpu_custom_call.1} parent=0
    _
  %s4 = ssub.s32 1, %s2
  %s5 = scalar_select 0, %s4, %s2
  $region1: #{tpu_custom_call.1} parent=0
    #allocation2 [shape = 'u8[4096]{0}', space=vmem, size = 0x1000, scoped, tag = 'input window, operand 0, single buffered']
    #allocation3 [shape = 's32[1]{0}', space=sflag, size = 0x4, scoped, tag = 'scoped memory for tpu_custom_call.1']
    #allocation4 [shape = 's32[1]{0}', space=sflag, size = 0x4, scoped, tag = 'scoped memory for tpu_custom_call.1']
    #allocation5 [shape = 'u8[4096]{0}', space=vmem, size = 0x1000, scoped, tag = 'output window, operand 0, single buffered']
    %6 = vsyncpa [#allocation3], 0
    %7 = vsyncpa [#allocation4], 0
    // Predicated region
    $region2: #{tpu_custom_call.1} parent=1 // pred_check
      _
    $region3: #{tpu_custom_call.1} parent=1 // pred_check_branch
      %9 = sbr.rel (0) target = $region5
    $region4: #{tpu_custom_call.1} parent=1 // pred_region
      %s11 = ssub.s32 128, 128
      %12 = vsyncadd [#allocation3], %s11
      %s14 = sshll.u32 [#allocation2], 4
      %s15 = int_to_ptr.vmem [resolvable:$true] %s14
      %17 = dma.hbm_to_vmem [thread:$0]  %s0, 128, %s15, [#allocation3]
    $region5: #{tpu_custom_call.1} parent=1 // pred_fallthru
      _
    // Predicated region
    $region6: #{tpu_custom_call.1} parent=1 // pred_check
      _
    $region7: #{tpu_custom_call.1} parent=1 // pred_check_branch
      %19 = sbr.rel (0) target = $region9
    $region8: #{tpu_custom_call.1} parent=1 // pred_region
      %20 = dma.done [#allocation3], 128
    $region9: #{tpu_custom_call.1} parent=1 // pred_fallthru
      _
    %v21 = vld [vmem:[#allocation2] sm:$0xff]
    %v22 = vmul.f32 %v21, %v21
    %23 = vadd.xlane.f32.xlu0 %v22
    %v24 = vpop.xlane.xlu0 %23
    %v25 = vmax.f32 %v24, 1e-24
    %v26 = vrsqrt.pop %v25
    %v27 = vmul.f32 %v21, %v26
    %28 = vst [vmem:[#allocation5] sm:$0xff] %v27
    // Predicated region
    $region10: #{tpu_custom_call.1} parent=1 // pred_check
      _
    $region11: #{tpu_custom_call.1} parent=1 // pred_check_branch
      %30 = sbr.rel (0) target = $region13
    $region12: #{tpu_custom_call.1} parent=1 // pred_region
      %s32 = ssub.s32 128, 128
      %33 = vsyncadd [#allocation4], %s32
      %s35 = sshll.u32 [#allocation5], 4
      %s36 = int_to_ptr.vmem [resolvable:$true] %s35
      %38 = dma.vmem_to_hbm [thread:$0]  %s36, 128, %s1, [#allocation4]
    $region13: #{tpu_custom_call.1} parent=1 // pred_fallthru
      _
    // Predicated region
    $region14: #{tpu_custom_call.1} parent=1 // pred_check
      _
    $region15: #{tpu_custom_call.1} parent=1 // pred_check_branch
      %40 = sbr.rel (0) target = $region17
    $region16: #{tpu_custom_call.1} parent=1 // pred_region
      %41 = dma.done [#allocation4], 128
    $region17: #{tpu_custom_call.1} parent=1 // pred_fallthru
      _
    %42 = vsyncpa [#allocation3], 1
    %43 = vsyncpa [#allocation4], 1

</llo_original>
